<compile_context>
chip_gen: v7x
topology: tpu7x:2x2x1
jax: 0.10.0
libtpu: 0.0.40
codegen_flags: <defaults>
</compile_context>

<pallas_src>
import jax
import jax.numpy as jnp
from jax.experimental import pallas as pl
from jax.experimental.pallas import tpu as pltpu

IE_DIM = 32          # X (input feature dim)
H1 = 512             # first hidden (hd == 1)
H2 = 128             # second hidden / classifier input (hd == 1)
NROWS = 8            # packed row-parameter slab rows (sublane aligned)
BATCH = 8
BN_EPS = 1e-5
NUM_DOMAINS = 2
OUT_LANES = 128      # lane-dense packed output width (one full vreg lane extent)


def _sigmoid(x):
    # tanh lands on the EUP; avoids a VALU divide from 1/(1+exp(-x)).
    return 0.5 * jnp.tanh(0.5 * x) + 0.5


def _dsnn_kernel(x_ref, w1_ref, w2_ref, rows_ref, b3_ref, out_ref):
    """Both domains' full forward, fully VMEM-resident, single launch, no grid."""
    x = x_ref[...]                                            # (B, IE_DIM) f32
    batch = x.shape[0]

    # Fused layer 1 across both domains (shared x): one MXU pass, N = 2*H1.
    # Eval-mode BatchNorm1d is pre-folded into W1/b1; Dropout is identity in eval.
    h = jnp.dot(x, w1_ref[...], preferred_element_type=jnp.float32)   # (B, 2*H1)
    h = h + rows_ref[0:1, :]                                  # b1_eff both domains (1, 2*H1)
    h = jnp.maximum(h, 0.0)                                   # ReLU

    lane = jax.lax.broadcasted_iota(jnp.int32, (batch, OUT_LANES), 1)
    out = jnp.zeros((batch, OUT_LANES), jnp.float32)

    for d in range(NUM_DOMAINS):                              # statically unrolled
        hd = h[:, d * H1:(d + 1) * H1]                        # (B, 512) lane-aligned slice

        # Linear(512, 128) -> Sigmoid
        g = jnp.dot(hd, w2_ref[d], preferred_element_type=jnp.float32)  # (B, 128)
        g = g + rows_ref[1:2, d * H2:(d + 1) * H2]            # b2_d (1, 128)
        g = _sigmoid(g)

        # ClassifierModule: Linear(128, 1) as VPU multiply + XLU lane reduce.
        w3_row = rows_ref[2:3, d * H2:(d + 1) * H2]           # (1, 128)
        logits = jnp.sum(g * w3_row, axis=-1, keepdims=True) + b3_ref[d]   # (B, 1)
        preds = _sigmoid(logits)

        # Pack into the lane-dense output: lane 2d = logits, lane 2d+1 = preds.
        out = out + jnp.where(lane == 2 * d, logits, 0.0)
        out = out + jnp.where(lane == 2 * d + 1, preds, 0.0)

    out_ref[...] = out                                        # single unmasked (8,128) store


@jax.jit
def _run_pallas(x, w1, w2, rows, b3):
    batch, in_dim = x.shape
    nd = w2.shape[0]

    flops = (2 * batch * in_dim * nd * H1          # fused layer 1
             + nd * 2 * batch * H1 * H2            # layer 2 per domain
             + nd * 2 * batch * H2)                # classifier per domain
    transcendentals = nd * batch * (H2 + 1)
    bytes_accessed = 4 * (x.size + w1.size + w2.size + rows.size + b3.size
                          + batch * OUT_LANES)

    return pl.pallas_call(
        _dsnn_kernel,
        out_shape=jax.ShapeDtypeStruct((batch, OUT_LANES), jnp.float32),
        in_specs=[
            pl.BlockSpec(memory_space=pltpu.MemorySpace.VMEM),   # x            (B, IE)
            pl.BlockSpec(memory_space=pltpu.MemorySpace.VMEM),   # W1 fused     (IE, 2*H1)
            pl.BlockSpec(memory_space=pltpu.MemorySpace.VMEM),   # W2 stacked   (2, H1, H2)
            pl.BlockSpec(memory_space=pltpu.MemorySpace.VMEM),   # row params   (NROWS, 2*H1)
            pl.BlockSpec(memory_space=pltpu.MemorySpace.SMEM),   # b3 scalars   (2,)
        ],
        out_specs=pl.BlockSpec(memory_space=pltpu.MemorySpace.VMEM),
        cost_estimate=pl.CostEstimate(
            flops=flops,
            transcendentals=transcendentals,
            bytes_accessed=bytes_accessed),
    )(x, w1, w2, rows, b3)


def _make_params(key, in_dim=IE_DIM):
    """Deterministic raw parameters for ONE domain (FeatModule + ClassifierModule)."""
    ks = jax.random.split(key, 8)

    def lin(kw, kb, fan_in, fan_out):
        bound = 1.0 / jnp.sqrt(fan_in)
        w = jax.random.uniform(kw, (fan_in, fan_out), jnp.float32, -bound, bound)
        b = jax.random.uniform(kb, (1, fan_out), jnp.float32, -bound, bound)
        return w, b

    w1, b1 = lin(ks[0], ks[1], in_dim, H1)
    w2, b2 = lin(ks[2], ks[3], H1, H2)
    w3, b3 = lin(ks[4], ks[5], H2, 1)

    # BatchNorm1d(512): non-trivial but deterministic affine params / running stats.
    gamma = 1.0 + 0.05 * jax.random.normal(ks[6], (1, H1), jnp.float32)
    beta = 0.05 * jax.random.normal(ks[7], (1, H1), jnp.float32)
    run_mean = jnp.zeros((1, H1), jnp.float32)
    run_var = jnp.ones((1, H1), jnp.float32)

    return dict(w1=w1, b1=b1, gamma=gamma, beta=beta,
                mean=run_mean, var=run_var,
                w2=w2, b2=b2, w3=w3, b3=b3)


def _pack_params(raw_params):
    """Fold eval-mode BN into W1/b1, fuse layer-1 weights across domains, pack rows."""
    w1_cols, w2s, b3s = [], [], []
    rows = jnp.zeros((NROWS, NUM_DOMAINS * H1), jnp.float32)
    for d, p in enumerate(raw_params):
        scale = p["gamma"] * jax.lax.rsqrt(p["var"] + BN_EPS)          # (1, H1)
        w1_eff = p["w1"] * scale                                       # (IE, H1)
        b1_eff = (p["b1"] - p["mean"]) * scale + p["beta"]             # (1, H1)

        w1_cols.append(w1_eff)
        w2s.append(p["w2"])
        rows = rows.at[0, d * H1:(d + 1) * H1].set(b1_eff[0])          # row 0: b1_eff concat
        rows = rows.at[1, d * H2:(d + 1) * H2].set(p["b2"][0])         # row 1: b2 per domain
        rows = rows.at[2, d * H2:(d + 1) * H2].set(p["w3"][:, 0])      # row 2: w3 per domain
        b3s.append(p["b3"][0, 0])

    w1_fused = jnp.concatenate(w1_cols, axis=1)                        # (IE, 2*H1)
    w2 = jnp.stack(w2s)                                                # (2, H1, H2)
    b3 = jnp.stack(b3s).astype(jnp.float32)                            # (2,)
    return w1_fused, w2, rows, b3


class DomainSpecificNNPallas:
    """JAX/Pallas port of DomainSpecificNN (hd == 1), eval-mode forward."""

    def __init__(self, key, in_dim=IE_DIM):
        keys = jax.random.split(key, NUM_DOMAINS)
        self.raw_params = [_make_params(k, in_dim) for k in keys]
        self.w1, self.w2, self.rows, self.b3 = _pack_params(self.raw_params)

    def forward_all(self, x):
        """ONE pallas_call computing both domains; returns a (B, 128) lane-dense output."""
        return _run_pallas(x, self.w1, self.w2, self.rows, self.b3)

    @staticmethod
    def unpack(out_all, domain):
        logits = out_all[:, 2 * domain:2 * domain + 1]
        end_points = {"Predictions": out_all[:, 2 * domain + 1:2 * domain + 2]}
        return logits, end_points

    def forward(self, x, domain):
        return self.unpack(self.forward_all(x), domain)


def _reference(x, p):
    """Plain-JAX reference of the ORIGINAL (unfolded) forward, for sanity checks."""
    h = x @ p["w1"] + p["b1"]
    h = (h - p["mean"]) / jnp.sqrt(p["var"] + BN_EPS) * p["gamma"] + p["beta"]
    h = jnp.maximum(h, 0.0)
    h = jax.nn.sigmoid(h @ p["w2"] + p["b2"])
    logits = h @ p["w3"] + p["b3"]
    return logits, jax.nn.sigmoid(logits)


if __name__ == "__main__":
    key = jax.random.PRNGKey(0)
    k_model, k_x = jax.random.split(key)

    model = DomainSpecificNNPallas(k_model, in_dim=IE_DIM)
    x = jax.random.normal(k_x, (BATCH, IE_DIM), jnp.float32)

    # Single grid-less kernel launch covers both domains.
    out_all = model.forward_all(x)
    jax.block_until_ready(out_all)

    logits0, ep0 = DomainSpecificNNPallas.unpack(out_all, 0)
    logits1, ep1 = DomainSpecificNNPallas.unpack(out_all, 1)

    # Module-style API (same single-launch kernel internally).
    l0, e0 = model.forward(x, 0)
    jax.block_until_ready(l0)
    assert jnp.array_equal(l0, logits0)

    # Sanity check both domains against the plain-JAX (unfolded-BN) reference.
    for dom, (lg, ep) in enumerate([(logits0, ep0), (logits1, ep1)]):
        ref_logits, ref_preds = _reference(x, model.raw_params[dom])
        assert jnp.allclose(lg, ref_logits, atol=1e-4, rtol=1e-4)
        assert jnp.allclose(ep["Predictions"], ref_preds, atol=1e-4, rtol=1e-4)

    print("KERNEL_OK")
</pallas_src>

<mosaic_0001>
module attributes {stable_mosaic.version = 11 : i64} {
  func.func @_dsnn_kernel(%arg0: memref<8x32xf32, #tpu.memory_space<vmem>>, %arg1: memref<32x1024xf32, #tpu.memory_space<vmem>>, %arg2: memref<2x512x128xf32, #tpu.memory_space<vmem>>, %arg3: memref<8x1024xf32, #tpu.memory_space<vmem>>, %arg4: memref<2xf32, #tpu.memory_space<smem>>, %arg5: memref<8x128xf32, #tpu.memory_space<vmem>>) attributes {dimension_semantics = [], scalar_prefetch = 0 : i64, scratch_operands = 0 : i64, tpu.core_type = #tpu.core_type<tc>} {
    %c0 = arith.constant 0 : index
    %c0_0 = arith.constant 0 : index
    %0 = vector.load %arg0[%c0, %c0_0] : memref<8x32xf32, #tpu.memory_space<vmem>>, vector<8x32xf32>
    %c0_1 = arith.constant 0 : index
    %c0_2 = arith.constant 0 : index
    %1 = vector.load %arg1[%c0_1, %c0_2] : memref<32x1024xf32, #tpu.memory_space<vmem>>, vector<32x1024xf32>
    %cst = arith.constant dense<0.000000e+00> : vector<8x1024xf32>
    %2 = tpu.matmul %0, %1, %cst {dimension_numbers = #tpu.dot_dimension_numbers<[1], [0], [0], [1], [0, 0, 1, 1], [], []>} : vector<8x32xf32>, vector<32x1024xf32>, vector<8x1024xf32> -> vector<8x1024xf32>
    %c0_3 = arith.constant 0 : index
    %c0_4 = arith.constant 0 : index
    %3 = vector.load %arg3[%c0_3, %c0_4] : memref<8x1024xf32, #tpu.memory_space<vmem>>, vector<1x1024xf32>
    %4 = vector.broadcast %3 : vector<1x1024xf32> to vector<8x1024xf32>
    %5 = arith.addf %2, %4 : vector<8x1024xf32>
    %cst_5 = arith.constant 0.000000e+00 : f32
    %6 = vector.broadcast %cst_5 : f32 to vector<8x1024xf32>
    %7 = arith.maximumf %5, %6 : vector<8x1024xf32>
    %8 = tpu.iota {dimensions = array<i32: 1>} : vector<8x128xi32>
    %cst_6 = arith.constant 0.000000e+00 : f32
    %9 = vector.broadcast %cst_6 : f32 to vector<8x128xf32>
    %10 = vector.extract_strided_slice %7 {offsets = [0, 0], sizes = [8, 512], strides = [1, 1]} : vector<8x1024xf32> to vector<8x512xf32>
    %c0_7 = arith.constant 0 : index
    %c0_8 = arith.constant 0 : index
    %c0_9 = arith.constant 0 : index
    %11 = vector.load %arg2[%c0_7, %c0_8, %c0_9] : memref<2x512x128xf32, #tpu.memory_space<vmem>>, vector<1x512x128xf32>
    %12 = vector.shape_cast %11 : vector<1x512x128xf32> to vector<512x128xf32>
    %cst_10 = arith.constant dense<0.000000e+00> : vector<8x128xf32>
    %13 = tpu.matmul %10, %12, %cst_10 {dimension_numbers = #tpu.dot_dimension_numbers<[1], [0], [0], [1], [0, 0, 1, 1], [], []>} : vector<8x512xf32>, vector<512x128xf32>, vector<8x128xf32> -> vector<8x128xf32>
    %c1 = arith.constant 1 : index
    %c0_11 = arith.constant 0 : index
    %14 = vector.load %arg3[%c1, %c0_11] : memref<8x1024xf32, #tpu.memory_space<vmem>>, vector<1x128xf32>
    %15 = vector.broadcast %14 : vector<1x128xf32> to vector<8x128xf32>
    %16 = arith.addf %13, %15 : vector<8x128xf32>
    %cst_12 = arith.constant 5.000000e-01 : f32
    %17 = vector.broadcast %cst_12 : f32 to vector<8x128xf32>
    %18 = arith.mulf %17, %16 : vector<8x128xf32>
    %19 = math.tanh %18 : vector<8x128xf32>
    %cst_13 = arith.constant 5.000000e-01 : f32
    %20 = vector.broadcast %cst_13 : f32 to vector<8x128xf32>
    %21 = arith.mulf %20, %19 : vector<8x128xf32>
    %cst_14 = arith.constant 5.000000e-01 : f32
    %22 = vector.broadcast %cst_14 : f32 to vector<8x128xf32>
    %23 = arith.addf %21, %22 : vector<8x128xf32>
    %c2 = arith.constant 2 : index
    %c0_15 = arith.constant 0 : index
    %24 = vector.load %arg3[%c2, %c0_15] : memref<8x1024xf32, #tpu.memory_space<vmem>>, vector<1x128xf32>
    %25 = vector.broadcast %24 : vector<1x128xf32> to vector<8x128xf32>
    %26 = arith.mulf %23, %25 : vector<8x128xf32>
    %cst_16 = arith.constant dense<0.000000e+00> : vector<8xf32>
    %27 = vector.multi_reduction <add>, %26, %cst_16 [1] : vector<8x128xf32> to vector<8xf32>
    %28 = vector.shape_cast %27 : vector<8xf32> to vector<8x1xf32>
    %c0_17 = arith.constant 0 : index
    %29 = memref.load %arg4[%c0_17] : memref<2xf32, #tpu.memory_space<smem>>
    %30 = vector.broadcast %29 : f32 to vector<8x1xf32>
    %31 = arith.addf %28, %30 : vector<8x1xf32>
    %cst_18 = arith.constant 5.000000e-01 : f32
    %32 = vector.broadcast %cst_18 : f32 to vector<8x1xf32>
    %33 = arith.mulf %32, %31 : vector<8x1xf32>
    %34 = math.tanh %33 : vector<8x1xf32>
    %cst_19 = arith.constant 5.000000e-01 : f32
    %35 = vector.broadcast %cst_19 : f32 to vector<8x1xf32>
    %36 = arith.mulf %35, %34 : vector<8x1xf32>
    %cst_20 = arith.constant 5.000000e-01 : f32
    %37 = vector.broadcast %cst_20 : f32 to vector<8x1xf32>
    %38 = arith.addf %36, %37 : vector<8x1xf32>
    %c0_i32 = arith.constant 0 : i32
    %39 = vector.broadcast %c0_i32 : i32 to vector<8x128xi32>
    %40 = arith.cmpi eq, %8, %39 : vector<8x128xi32>
    %cst_21 = arith.constant 0.000000e+00 : f32
    %41 = vector.shape_cast %31 : vector<8x1xf32> to vector<8x1xf32>
    %42 = vector.broadcast %41 : vector<8x1xf32> to vector<8x128xf32>
    %43 = vector.broadcast %cst_21 : f32 to vector<8x128xf32>
    %44 = arith.select %40, %42, %43 : vector<8x128xi1>, vector<8x128xf32>
    %45 = arith.addf %9, %44 : vector<8x128xf32>
    %c1_i32 = arith.constant 1 : i32
    %46 = vector.broadcast %c1_i32 : i32 to vector<8x128xi32>
    %47 = arith.cmpi eq, %8, %46 : vector<8x128xi32>
    %cst_22 = arith.constant 0.000000e+00 : f32
    %48 = vector.shape_cast %38 : vector<8x1xf32> to vector<8x1xf32>
    %49 = vector.broadcast %48 : vector<8x1xf32> to vector<8x128xf32>
    %50 = vector.broadcast %cst_22 : f32 to vector<8x128xf32>
    %51 = arith.select %47, %49, %50 : vector<8x128xi1>, vector<8x128xf32>
    %52 = arith.addf %45, %51 : vector<8x128xf32>
    %53 = vector.extract_strided_slice %7 {offsets = [0, 512], sizes = [8, 512], strides = [1, 1]} : vector<8x1024xf32> to vector<8x512xf32>
    %c1_23 = arith.constant 1 : index
    %c0_24 = arith.constant 0 : index
    %c0_25 = arith.constant 0 : index
    %54 = vector.load %arg2[%c1_23, %c0_24, %c0_25] : memref<2x512x128xf32, #tpu.memory_space<vmem>>, vector<1x512x128xf32>
    %55 = vector.shape_cast %54 : vector<1x512x128xf32> to vector<512x128xf32>
    %cst_26 = arith.constant dense<0.000000e+00> : vector<8x128xf32>
    %56 = tpu.matmul %53, %55, %cst_26 {dimension_numbers = #tpu.dot_dimension_numbers<[1], [0], [0], [1], [0, 0, 1, 1], [], []>} : vector<8x512xf32>, vector<512x128xf32>, vector<8x128xf32> -> vector<8x128xf32>
    %c1_27 = arith.constant 1 : index
    %c128 = arith.constant 128 : index
    %57 = vector.load %arg3[%c1_27, %c128] : memref<8x1024xf32, #tpu.memory_space<vmem>>, vector<1x128xf32>
    %58 = vector.broadcast %57 : vector<1x128xf32> to vector<8x128xf32>
    %59 = arith.addf %56, %58 : vector<8x128xf32>
    %cst_28 = arith.constant 5.000000e-01 : f32
    %60 = vector.broadcast %cst_28 : f32 to vector<8x128xf32>
    %61 = arith.mulf %60, %59 : vector<8x128xf32>
    %62 = math.tanh %61 : vector<8x128xf32>
    %cst_29 = arith.constant 5.000000e-01 : f32
    %63 = vector.broadcast %cst_29 : f32 to vector<8x128xf32>
    %64 = arith.mulf %63, %62 : vector<8x128xf32>
    %cst_30 = arith.constant 5.000000e-01 : f32
    %65 = vector.broadcast %cst_30 : f32 to vector<8x128xf32>
    %66 = arith.addf %64, %65 : vector<8x128xf32>
    %c2_31 = arith.constant 2 : index
    %c128_32 = arith.constant 128 : index
    %67 = vector.load %arg3[%c2_31, %c128_32] : memref<8x1024xf32, #tpu.memory_space<vmem>>, vector<1x128xf32>
    %68 = vector.broadcast %67 : vector<1x128xf32> to vector<8x128xf32>
    %69 = arith.mulf %66, %68 : vector<8x128xf32>
    %cst_33 = arith.constant dense<0.000000e+00> : vector<8xf32>
    %70 = vector.multi_reduction <add>, %69, %cst_33 [1] : vector<8x128xf32> to vector<8xf32>
    %71 = vector.shape_cast %70 : vector<8xf32> to vector<8x1xf32>
    %c1_34 = arith.constant 1 : index
    %72 = memref.load %arg4[%c1_34] : memref<2xf32, #tpu.memory_space<smem>>
    %73 = vector.broadcast %72 : f32 to vector<8x1xf32>
    %74 = arith.addf %71, %73 : vector<8x1xf32>
    %cst_35 = arith.constant 5.000000e-01 : f32
    %75 = vector.broadcast %cst_35 : f32 to vector<8x1xf32>
    %76 = arith.mulf %75, %74 : vector<8x1xf32>
    %77 = math.tanh %76 : vector<8x1xf32>
    %cst_36 = arith.constant 5.000000e-01 : f32
    %78 = vector.broadcast %cst_36 : f32 to vector<8x1xf32>
    %79 = arith.mulf %78, %77 : vector<8x1xf32>
    %cst_37 = arith.constant 5.000000e-01 : f32
    %80 = vector.broadcast %cst_37 : f32 to vector<8x1xf32>
    %81 = arith.addf %79, %80 : vector<8x1xf32>
    %c2_i32 = arith.constant 2 : i32
    %82 = vector.broadcast %c2_i32 : i32 to vector<8x128xi32>
    %83 = arith.cmpi eq, %8, %82 : vector<8x128xi32>
    %cst_38 = arith.constant 0.000000e+00 : f32
    %84 = vector.shape_cast %74 : vector<8x1xf32> to vector<8x1xf32>
    %85 = vector.broadcast %84 : vector<8x1xf32> to vector<8x128xf32>
    %86 = vector.broadcast %cst_38 : f32 to vector<8x128xf32>
    %87 = arith.select %83, %85, %86 : vector<8x128xi1>, vector<8x128xf32>
    %88 = arith.addf %52, %87 : vector<8x128xf32>
    %c3_i32 = arith.constant 3 : i32
    %89 = vector.broadcast %c3_i32 : i32 to vector<8x128xi32>
    %90 = arith.cmpi eq, %8, %89 : vector<8x128xi32>
    %cst_39 = arith.constant 0.000000e+00 : f32
    %91 = vector.shape_cast %81 : vector<8x1xf32> to vector<8x1xf32>
    %92 = vector.broadcast %91 : vector<8x1xf32> to vector<8x128xf32>
    %93 = vector.broadcast %cst_39 : f32 to vector<8x128xf32>
    %94 = arith.select %90, %92, %93 : vector<8x128xi1>, vector<8x128xf32>
    %95 = arith.addf %88, %94 : vector<8x128xf32>
    %c0_40 = arith.constant 0 : index
    %c0_41 = arith.constant 0 : index
    %96 = vector.load %arg5[%c0_40, %c0_41] : memref<8x128xf32, #tpu.memory_space<vmem>>, vector<8x128xf32>
    tpu.vector_store %arg5[%c0_40, %c0_41], %95 {strides = array<i32>} : memref<8x128xf32, #tpu.memory_space<vmem>>, vector<8x128xf32>,
    return
  }
}

</mosaic_0001>

<llo_original>
// kernel: _run_pallas.1
$region0: #{_run_pallas.1}
  #allocation0 [shape = 'u32[]', space=smem, size = 0x4, offset = 0x4, fixed_abs, tag = 'smem constant byte address 0x4 - core index']
  #allocation1 [shape = 'u32[144,128]{1,0:T(1,128)}', space=vmem, size = 0x12000, scoped, tag = 'internal scratch']
  %s0 = inlined_call_operand.hbm [shape: f32[8,32], index: 0, kind: input, shape index: {}]
  %s1 = inlined_call_operand.hbm [shape: f32[32,1024], index: 1, kind: input, shape index: {}]
  %s2 = inlined_call_operand.hbm [shape: f32[2,512,128], index: 2, kind: input, shape index: {}]
  %s3 = inlined_call_operand.hbm [shape: f32[8,1024], index: 3, kind: input, shape index: {}]
  %s4 = inlined_call_operand.vmem [shape: f32[2], index: 4, kind: input, shape index: {}]
  %s5 = inlined_call_operand.hbm [shape: f32[8,128], index: 5, kind: output, shape index: {}]
  %s6 = sld [smem:[#allocation0]]
  $region50: #{_run_pallas.1} parent=0
    _
  %s8 = ssub.s32 1, %s6
  %s9 = scalar_select 0, %s8, %s6
  $region1: #{_run_pallas.1} parent=0
    #allocation2 [shape = 'u8[4096]{0}', space=vmem, size = 0x1000, scoped, tag = 'input window, operand 0, single buffered']
    #allocation3 [shape = 's32[1]{0}', space=sflag, size = 0x4, scoped, tag = 'scoped memory for _run_pallas.1']
    #allocation4 [shape = 's32[1]{0}', space=sflag, size = 0x4, scoped, tag = 'scoped memory for _run_pallas.1']
    #allocation5 [shape = 's32[1]{0}', space=sflag, size = 0x4, scoped, tag = 'scoped memory for _run_pallas.1']
    #allocation6 [shape = 'u8[131072]{0}', space=vmem, size = 0x20000, scoped, tag = 'input window, operand 1, single buffered']
    #allocation7 [shape = 's32[1]{0}', space=sflag, size = 0x4, scoped, tag = 'scoped memory for _run_pallas.1']
    #allocation8 [shape = 'u8[524288]{0}', space=vmem, size = 0x80000, scoped, tag = 'input window, operand 2, single buffered']
    #allocation9 [shape = 'u8[32768]{0}', space=vmem, size = 0x8000, scoped, tag = 'input window, operand 3, single buffered']
    #allocation10 [shape = 's32[1]{0}', space=sflag, size = 0x4, scoped, tag = 'scoped memory for _run_pallas.1']
    #allocation11 [shape = 'u8[512]{0}', space=smem, size = 0x200, scoped, tag = 'input window, operand 4, single buffered']
    #allocation12 [shape = 'u8[4096]{0}', space=vmem, size = 0x1000, scoped, tag = 'output window, operand 0, single buffered']
    %10 = vsyncpa [#allocation3], 0
    %11 = vsyncpa [#allocation7], 0
    %12 = vsyncpa [#allocation10], 0
    %13 = vsyncpa [#allocation5], 0
    %14 = vsyncpa [#allocation4], 0
    // Predicated region
    $region2: #{_run_pallas.1} parent=1 // pred_check
      _
    $region3: #{_run_pallas.1} parent=1 // pred_check_branch
      %16 = sbr.rel (0) target = $region5
    $region4: #{_run_pallas.1} parent=1 // pred_region
      %s18 = ssub.s32 128, 128
      %19 = vsyncadd [#allocation3], %s18
      %s21 = sshll.u32 [#allocation2], 4
      %s22 = int_to_ptr.vmem [resolvable:$true] %s21
      %24 = dma.hbm_to_vmem [thread:$0]  %s0, 128, %s22, [#allocation3]
    $region5: #{_run_pallas.1} parent=1 // pred_fallthru
      _
    // Predicated region
    $region6: #{_run_pallas.1} parent=1 // pred_check
      _
    $region7: #{_run_pallas.1} parent=1 // pred_check_branch
      %26 = sbr.rel (0) target = $region9
    $region8: #{_run_pallas.1} parent=1 // pred_region
      %s28 = ssub.s32 4096, 4096
      %29 = vsyncadd [#allocation7], %s28
      %s30 = sshll.u32 [#allocation6], 4
      %s31 = int_to_ptr.vmem [resolvable:$true] %s30
      %36 = dma.hbm_to_vmem [thread:$0]  %s1, 4096, %s31, [#allocation7], 1024, 1024, 64
    $region9: #{_run_pallas.1} parent=1 // pred_fallthru
      _
    // Predicated region
    $region10: #{_run_pallas.1} parent=1 // pred_check
      _
    $region11: #{_run_pallas.1} parent=1 // pred_check_branch
      %38 = sbr.rel (0) target = $region13
    $region12: #{_run_pallas.1} parent=1 // pred_region
      %s40 = ssub.s32 16384, 16384
      %41 = vsyncadd [#allocation7], %s40
      %s42 = sshll.u32 [#allocation8], 4
      %s43 = int_to_ptr.vmem [resolvable:$true] %s42
      %48 = dma.hbm_to_vmem [thread:$0]  %s2, 16384, %s43, [#allocation7], 128, 128, 8
    $region13: #{_run_pallas.1} parent=1 // pred_fallthru
      _
    // Predicated region
    $region14: #{_run_pallas.1} parent=1 // pred_check
      _
    $region15: #{_run_pallas.1} parent=1 // pred_check_branch
      %50 = sbr.rel (0) target = $region17
    $region16: #{_run_pallas.1} parent=1 // pred_region
      %s52 = ssub.s32 1024, 1024
      %53 = vsyncadd [#allocation10], %s52
      %s55 = sshll.u32 [#allocation9], 4
      %s56 = int_to_ptr.vmem [resolvable:$true] %s55
      %58 = dma.hbm_to_vmem [thread:$0]  %s3, 1024, %s56, [#allocation10]
    $region17: #{_run_pallas.1} parent=1 // pred_fallthru
      _
    // Predicated region
    $region18: #{_run_pallas.1} parent=1 // pred_check
      _
    $region19: #{_run_pallas.1} parent=1 // pred_check_branch
      %60 = sbr.rel (0) target = $region21
    $region20: #{_run_pallas.1} parent=1 // pred_region
      %s62 = ssub.s32 16, 16
      %63 = vsyncadd [#allocation5], %s62
      %s65 = sshll.u32 %s4, 4
      %s66 = int_to_ptr.vmem [resolvable:$true] %s65
      %68 = dma.vmem_to_smem %s66, 16, [#allocation11], [#allocation5]
    $region21: #{_run_pallas.1} parent=1 // pred_fallthru
      _
    // Predicated region
    $region22: #{_run_pallas.1} parent=1 // pred_check
      _
    $region23: #{_run_pallas.1} parent=1 // pred_check_branch
      %70 = sbr.rel (0) target = $region25
    $region24: #{_run_pallas.1} parent=1 // pred_region
      %71 = dma.done [#allocation3], 128
    $region25: #{_run_pallas.1} parent=1 // pred_fallthru
      _
    // Predicated region
    $region26: #{_run_pallas.1} parent=1 // pred_check
      _
    $region27: #{_run_pallas.1} parent=1 // pred_check_branch
      %73 = sbr.rel (0) target = $region29
    $region28: #{_run_pallas.1} parent=1 // pred_region
      %74 = dma.done [#allocation7], 4096
    $region29: #{_run_pallas.1} parent=1 // pred_fallthru
      _
    // Predicated region
    $region30: #{_run_pallas.1} parent=1 // pred_check
      _
    $region31: #{_run_pallas.1} parent=1 // pred_check_branch
      %76 = sbr.rel (0) target = $region33
    $region32: #{_run_pallas.1} parent=1 // pred_region
      %77 = dma.done [#allocation7], 16384
    $region33: #{_run_pallas.1} parent=1 // pred_fallthru
      _
    // Predicated region
    $region34: #{_run_pallas.1} parent=1 // pred_check
      _
    $region35: #{_run_pallas.1} parent=1 // pred_check_branch
      %79 = sbr.rel (0) target = $region37
    $region36: #{_run_pallas.1} parent=1 // pred_region
      %80 = dma.done [#allocation10], 1024
    $region37: #{_run_pallas.1} parent=1 // pred_fallthru
      _
    // Predicated region
    $region38: #{_run_pallas.1} parent=1 // pred_check
      _
    $region39: #{_run_pallas.1} parent=1 // pred_check_branch
      %82 = sbr.rel (0) target = $region41
    $region40: #{_run_pallas.1} parent=1 // pred_region
      %83 = dma.done [#allocation5], 16
    $region41: #{_run_pallas.1} parent=1 // pred_fallthru
      _
    %84 = sfence
    %v85 = vld [vmem:[#allocation2] sm:$0xff]
    %v86 = vld [vmem:[#allocation6] sm:$0xff]
    %v87 = vld [vmem:[#allocation6 + $0x8] sm:$0xff]
    %v88 = vld [vmem:[#allocation6 + $0x10] sm:$0xff]
    %v89 = vld [vmem:[#allocation6 + $0x18] sm:$0xff]
    %v90 = vld [vmem:[#allocation6 + $0x20] sm:$0xff]
    %v91 = vld [vmem:[#allocation6 + $0x28] sm:$0xff]
    %v92 = vld [vmem:[#allocation6 + $0x30] sm:$0xff]
    %v93 = vld [vmem:[#allocation6 + $0x38] sm:$0xff]
    %v94 = vld [vmem:[#allocation6 + $0x40] sm:$0xff]
    %v95 = vld [vmem:[#allocation6 + $0x48] sm:$0xff]
    %v96 = vld [vmem:[#allocation6 + $0x50] sm:$0xff]
    %v97 = vld [vmem:[#allocation6 + $0x58] sm:$0xff]
    %v98 = vld [vmem:[#allocation6 + $0x60] sm:$0xff]
    %v99 = vld [vmem:[#allocation6 + $0x68] sm:$0xff]
    %v100 = vld [vmem:[#allocation6 + $0x70] sm:$0xff]
    %v101 = vld [vmem:[#allocation6 + $0x78] sm:$0xff]
    %v102 = vld [vmem:[#allocation6 + $0x80] sm:$0xff]
    %v103 = vld [vmem:[#allocation6 + $0x88] sm:$0xff]
    %v104 = vld [vmem:[#allocation6 + $0x90] sm:$0xff]
    %v105 = vld [vmem:[#allocation6 + $0x98] sm:$0xff]
    %v106 = vld [vmem:[#allocation6 + $0xa0] sm:$0xff]
    %v107 = vld [vmem:[#allocation6 + $0xa8] sm:$0xff]
    %v108 = vld [vmem:[#allocation6 + $0xb0] sm:$0xff]
    %v109 = vld [vmem:[#allocation6 + $0xb8] sm:$0xff]
    %v110 = vld [vmem:[#allocation6 + $0xc0] sm:$0xff]
    %v111 = vld [vmem:[#allocation6 + $0xc8] sm:$0xff]
    %v112 = vld [vmem:[#allocation6 + $0xd0] sm:$0xff]
    %v113 = vld [vmem:[#allocation6 + $0xd8] sm:$0xff]
    %v114 = vld [vmem:[#allocation6 + $0xe0] sm:$0xff]
    %v115 = vld [vmem:[#allocation6 + $0xe8] sm:$0xff]
    %v116 = vld [vmem:[#allocation6 + $0xf0] sm:$0xff]
    %v117 = vld [vmem:[#allocation6 + $0xf8] sm:$0xff]
    %v118 = vld [vmem:[#allocation9] ss:$8 sm:$0xf]
    %v119 = vld [vmem:[#allocation9] ss:$8 sm:$0xf0]
    %v120 = vor.u32 %v118, %v119
    %v122 = vlaneseq
    %v123 = vshrl.u32 %v122, 7
    %v124 = vsub.s32 0, %v123
    %v125 = vrot.slane %v120, %v124
    %v126 = vlaneseq
    %v127 = vshrl.u32 %v126, 7
    %v128 = vsub.s32 1, %v127
    %v129 = vrot.slane %v120, %v128
    %v130 = vlaneseq
    %v131 = vshrl.u32 %v130, 7
    %v132 = vsub.s32 2, %v131
    %v133 = vrot.slane %v120, %v132
    %v134 = vlaneseq
    %v135 = vshrl.u32 %v134, 7
    %v136 = vsub.s32 3, %v135
    %v137 = vrot.slane %v120, %v136
    %v138 = vlaneseq
    %v139 = vshrl.u32 %v138, 7
    %v140 = vsub.s32 4, %v139
    %v141 = vrot.slane %v120, %v140
    %v142 = vlaneseq
    %v143 = vshrl.u32 %v142, 7
    %v144 = vsub.s32 5, %v143
    %v145 = vrot.slane %v120, %v144
    %v146 = vlaneseq
    %v147 = vshrl.u32 %v146, 7
    %v148 = vsub.s32 6, %v147
    %v149 = vrot.slane %v120, %v148
    %v150 = vlaneseq
    %v151 = vshrl.u32 %v150, 7
    %v152 = vsub.s32 7, %v151
    %v153 = vrot.slane %v120, %v152
    %vm162 = vcmask 261120
    %v164 = vsel %vm162, %v85, 0
    %166 = vmatprep.subr.mxu0 %v87
    %167 = vmatpush1.msra.mxu0 %v86
    %168 = vmatprep.subr.mxu0 %v95
    %169 = vmatpush1.msra.mxu0 %v94
    %170 = vmatprep.subr.mxu0 %v103
    %171 = vmatpush1.msra.mxu0 %v102
    %172 = vmatprep.subr.mxu0 %v111
    %173 = vmatpush1.msra.mxu0 %v110
    %174 = vmatprep.subr.mxu0 0.0
    %175 = vmatpush1.msra.mxu0 0.0
    %176 = vmatprep.subr.mxu0 0.0
    %177 = vmatpush1.msra.mxu0 0.0
    %178 = vmatprep.subr.mxu0 0.0
    %179 = vmatpush1.msra.mxu0 0.0
    %180 = vmatprep.subr.mxu0 0.0
    %181 = vmatpush1.msra.mxu0 0.0
    %182 = vmatprep.subr.mxu0 0.0
    %183 = vmatpush1.msra.mxu0 0.0
    %184 = vmatprep.subr.mxu0 0.0
    %185 = vmatpush1.msra.mxu0 0.0
    %186 = vmatprep.subr.mxu0 0.0
    %187 = vmatpush1.msra.mxu0 0.0
    %188 = vmatprep.subr.mxu0 0.0
    %189 = vmatpush1.msra.mxu0 0.0
    %190 = vmatprep.subr.mxu0 0.0
    %191 = vmatpush1.msra.mxu0 0.0
    %192 = vmatprep.subr.mxu0 0.0
    %193 = vmatpush1.msra.mxu0 0.0
    %194 = vmatprep.subr.mxu0 0.0
    %195 = vmatpush1.msra.mxu0 0.0
    %196 = vmatprep.subr.mxu0 0.0
    %197 = vmatpush1.msra.mxu0 0.0
    %198 = vmatprep.subr.mxu0 0.0
    %199 = vmatpush1.msra.mxu0 0.0
    %200 = vmatprep.subr.mxu0 0.0
    %201 = vmatpush1.msra.mxu0 0.0
    %202 = vmatprep.subr.mxu0 0.0
    %203 = vmatpush1.msra.mxu0 0.0
    %204 = vmatprep.subr.mxu0 0.0
    %205 = vmatpush1.msra.mxu0 0.0
    %206 = vmatprep.subr.mxu0 0.0
    %207 = vmatpush1.msra.mxu0 0.0
    %208 = vmatprep.subr.mxu0 0.0
    %209 = vmatpush1.msra.mxu0 0.0
    %210 = vmatprep.subr.mxu0 0.0
    %211 = vmatpush1.msra.mxu0 0.0
    %212 = vmatprep.subr.mxu0 0.0
    %213 = vmatpush1.msra.mxu0 0.0
    %214 = vmatprep.subr.mxu0 0.0
    %215 = vmatpush1.msra.mxu0 0.0
    %216 = vmatprep.subr.mxu0 0.0
    %217 = vmatpush1.msra.mxu0 0.0
    %218 = vmatprep.subr.mxu0 0.0
    %219 = vmatpush1.msra.mxu0 0.0
    %220 = vmatprep.subr.mxu0 0.0
    %221 = vmatpush1.msra.mxu0 0.0
    %222 = vmatprep.subr.mxu0 0.0
    %223 = vmatpush1.msra.mxu0 0.0
    %224 = vmatprep.subr.mxu0 0.0
    %225 = vmatpush1.msra.mxu0 0.0
    %226 = vmatprep.subr.mxu0 0.0
    %227 = vmatpush1.msra.mxu0 0.0
    %228 = vmatprep.subr.mxu0 0.0
    %229 = vmatpush1.msra.mxu0 0.0
    %230 = vmatprep.mubr.f32.mxu0 0.0
    %231 = vmatmul.mubr.f32.gmra.mrb[0].mxu0 %v164
    %v232 = vpop.f32.mrb[0].mxu0
    %v233 = vadd.f32 %v125, %v232
    %v234 = vpop.f32.mrb[0].mxu0
    %v235 = vadd.f32 %v129, %v234
    %236 = vdwg.mxu0
    %237 = vmatprep.subr.mxu0 %v89
    %238 = vmatpush1.msra.mxu0 %v88
    %239 = vmatprep.subr.mxu0 %v97
    %240 = vmatpush1.msra.mxu0 %v96
    %241 = vmatprep.subr.mxu0 %v105
    %242 = vmatpush1.msra.mxu0 %v104
    %243 = vmatprep.subr.mxu0 %v113
    %244 = vmatpush1.msra.mxu0 %v112
    %245 = vmatprep.subr.mxu0 0.0
    %246 = vmatpush1.msra.mxu0 0.0
    %247 = vmatprep.subr.mxu0 0.0
    %248 = vmatpush1.msra.mxu0 0.0
    %249 = vmatprep.subr.mxu0 0.0
    %250 = vmatpush1.msra.mxu0 0.0
    %251 = vmatprep.subr.mxu0 0.0
    %252 = vmatpush1.msra.mxu0 0.0
    %253 = vmatprep.subr.mxu0 0.0
    %254 = vmatpush1.msra.mxu0 0.0
    %255 = vmatprep.subr.mxu0 0.0
    %256 = vmatpush1.msra.mxu0 0.0
    %257 = vmatprep.subr.mxu0 0.0
    %258 = vmatpush1.msra.mxu0 0.0
    %259 = vmatprep.subr.mxu0 0.0
    %260 = vmatpush1.msra.mxu0 0.0
    %261 = vmatprep.subr.mxu0 0.0
    %262 = vmatpush1.msra.mxu0 0.0
    %263 = vmatprep.subr.mxu0 0.0
    %264 = vmatpush1.msra.mxu0 0.0
    %265 = vmatprep.subr.mxu0 0.0
    %266 = vmatpush1.msra.mxu0 0.0
    %267 = vmatprep.subr.mxu0 0.0
    %268 = vmatpush1.msra.mxu0 0.0
    %269 = vmatprep.subr.mxu0 0.0
    %270 = vmatpush1.msra.mxu0 0.0
    %271 = vmatprep.subr.mxu0 0.0
    %272 = vmatpush1.msra.mxu0 0.0
    %273 = vmatprep.subr.mxu0 0.0
    %274 = vmatpush1.msra.mxu0 0.0
    %275 = vmatprep.subr.mxu0 0.0
    %276 = vmatpush1.msra.mxu0 0.0
    %277 = vmatprep.subr.mxu0 0.0
    %278 = vmatpush1.msra.mxu0 0.0
    %279 = vmatprep.subr.mxu0 0.0
    %280 = vmatpush1.msra.mxu0 0.0
    %281 = vmatprep.subr.mxu0 0.0
    %282 = vmatpush1.msra.mxu0 0.0
    %283 = vmatprep.subr.mxu0 0.0
    %284 = vmatpush1.msra.mxu0 0.0
    %285 = vmatprep.subr.mxu0 0.0
    %286 = vmatpush1.msra.mxu0 0.0
    %287 = vmatprep.subr.mxu0 0.0
    %288 = vmatpush1.msra.mxu0 0.0
    %289 = vmatprep.subr.mxu0 0.0
    %290 = vmatpush1.msra.mxu0 0.0
    %291 = vmatprep.subr.mxu0 0.0
    %292 = vmatpush1.msra.mxu0 0.0
    %293 = vmatprep.subr.mxu0 0.0
    %294 = vmatpush1.msra.mxu0 0.0
    %295 = vmatprep.subr.mxu0 0.0
    %296 = vmatpush1.msra.mxu0 0.0
    %297 = vmatprep.subr.mxu0 0.0
    %298 = vmatpush1.msra.mxu0 0.0
    %299 = vmatprep.subr.mxu0 0.0
    %300 = vmatpush1.msra.mxu0 0.0
    %301 = vmatprep.mubr.f32.mxu0 0.0
    %302 = vmatmul.mubr.f32.gmra.mrb[0].mxu0 %v164
    %v303 = vpop.f32.mrb[0].mxu0
    %v304 = vadd.f32 %v133, %v303
    %v305 = vpop.f32.mrb[0].mxu0
    %v306 = vadd.f32 %v137, %v305
    %307 = vdwg.mxu0
    %308 = vmatprep.subr.mxu0 %v91
    %309 = vmatpush1.msra.mxu0 %v90
    %310 = vmatprep.subr.mxu0 %v99
    %311 = vmatpush1.msra.mxu0 %v98
    %312 = vmatprep.subr.mxu0 %v107
    %313 = vmatpush1.msra.mxu0 %v106
    %314 = vmatprep.subr.mxu0 %v115
    %315 = vmatpush1.msra.mxu0 %v114
    %316 = vmatprep.subr.mxu0 0.0
    %317 = vmatpush1.msra.mxu0 0.0
    %318 = vmatprep.subr.mxu0 0.0
    %319 = vmatpush1.msra.mxu0 0.0
    %320 = vmatprep.subr.mxu0 0.0
    %321 = vmatpush1.msra.mxu0 0.0
    %322 = vmatprep.subr.mxu0 0.0
    %323 = vmatpush1.msra.mxu0 0.0
    %324 = vmatprep.subr.mxu0 0.0
    %325 = vmatpush1.msra.mxu0 0.0
    %326 = vmatprep.subr.mxu0 0.0
    %327 = vmatpush1.msra.mxu0 0.0
    %328 = vmatprep.subr.mxu0 0.0
    %329 = vmatpush1.msra.mxu0 0.0
    %330 = vmatprep.subr.mxu0 0.0
    %331 = vmatpush1.msra.mxu0 0.0
    %332 = vmatprep.subr.mxu0 0.0
    %333 = vmatpush1.msra.mxu0 0.0
    %334 = vmatprep.subr.mxu0 0.0
    %335 = vmatpush1.msra.mxu0 0.0
    %336 = vmatprep.subr.mxu0 0.0
    %337 = vmatpush1.msra.mxu0 0.0
    %338 = vmatprep.subr.mxu0 0.0
    %339 = vmatpush1.msra.mxu0 0.0
    %340 = vmatprep.subr.mxu0 0.0
    %341 = vmatpush1.msra.mxu0 0.0
    %342 = vmatprep.subr.mxu0 0.0
    %343 = vmatpush1.msra.mxu0 0.0
    %344 = vmatprep.subr.mxu0 0.0
    %345 = vmatpush1.msra.mxu0 0.0
    %346 = vmatprep.subr.mxu0 0.0
    %347 = vmatpush1.msra.mxu0 0.0
    %348 = vmatprep.subr.mxu0 0.0
    %349 = vmatpush1.msra.mxu0 0.0
    %350 = vmatprep.subr.mxu0 0.0
    %351 = vmatpush1.msra.mxu0 0.0
    %352 = vmatprep.subr.mxu0 0.0
    %353 = vmatpush1.msra.mxu0 0.0
    %354 = vmatprep.subr.mxu0 0.0
    %355 = vmatpush1.msra.mxu0 0.0
    %356 = vmatprep.subr.mxu0 0.0
    %357 = vmatpush1.msra.mxu0 0.0
    %358 = vmatprep.subr.mxu0 0.0
    %359 = vmatpush1.msra.mxu0 0.0
    %360 = vmatprep.subr.mxu0 0.0
    %361 = vmatpush1.msra.mxu0 0.0
    %362 = vmatprep.subr.mxu0 0.0
    %363 = vmatpush1.msra.mxu0 0.0
    %364 = vmatprep.subr.mxu0 0.0
    %365 = vmatpush1.msra.mxu0 0.0
    %366 = vmatprep.subr.mxu0 0.0
    %367 = vmatpush1.msra.mxu0 0.0
    %368 = vmatprep.subr.mxu0 0.0
    %369 = vmatpush1.msra.mxu0 0.0
    %370 = vmatprep.subr.mxu0 0.0
    %371 = vmatpush1.msra.mxu0 0.0
    %372 = vmatprep.mubr.f32.mxu0 0.0
    %373 = vmatmul.mubr.f32.gmra.mrb[0].mxu0 %v164
    %v374 = vpop.f32.mrb[0].mxu0
    %v375 = vadd.f32 %v141, %v374
    %v376 = vpop.f32.mrb[0].mxu0
    %v377 = vadd.f32 %v145, %v376
    %378 = vdwg.mxu0
    %379 = vmatprep.subr.mxu0 %v93
    %380 = vmatpush1.msra.mxu0 %v92
    %381 = vmatprep.subr.mxu0 %v101
    %382 = vmatpush1.msra.mxu0 %v100
    %383 = vmatprep.subr.mxu0 %v109
    %384 = vmatpush1.msra.mxu0 %v108
    %385 = vmatprep.subr.mxu0 %v117
    %386 = vmatpush1.msra.mxu0 %v116
    %387 = vmatprep.subr.mxu0 0.0
    %388 = vmatpush1.msra.mxu0 0.0
    %389 = vmatprep.subr.mxu0 0.0
    %390 = vmatpush1.msra.mxu0 0.0
    %391 = vmatprep.subr.mxu0 0.0
    %392 = vmatpush1.msra.mxu0 0.0
    %393 = vmatprep.subr.mxu0 0.0
    %394 = vmatpush1.msra.mxu0 0.0
    %395 = vmatprep.subr.mxu0 0.0
    %396 = vmatpush1.msra.mxu0 0.0
    %397 = vmatprep.subr.mxu0 0.0
    %398 = vmatpush1.msra.mxu0 0.0
    %399 = vmatprep.subr.mxu0 0.0
    %400 = vmatpush1.msra.mxu0 0.0
    %401 = vmatprep.subr.mxu0 0.0
    %402 = vmatpush1.msra.mxu0 0.0
    %403 = vmatprep.subr.mxu0 0.0
    %404 = vmatpush1.msra.mxu0 0.0
    %405 = vmatprep.subr.mxu0 0.0
    %406 = vmatpush1.msra.mxu0 0.0
    %407 = vmatprep.subr.mxu0 0.0
    %408 = vmatpush1.msra.mxu0 0.0
    %409 = vmatprep.subr.mxu0 0.0
    %410 = vmatpush1.msra.mxu0 0.0
    %411 = vmatprep.subr.mxu0 0.0
    %412 = vmatpush1.msra.mxu0 0.0
    %413 = vmatprep.subr.mxu0 0.0
    %414 = vmatpush1.msra.mxu0 0.0
    %415 = vmatprep.subr.mxu0 0.0
    %416 = vmatpush1.msra.mxu0 0.0
    %417 = vmatprep.subr.mxu0 0.0
    %418 = vmatpush1.msra.mxu0 0.0
    %419 = vmatprep.subr.mxu0 0.0
    %420 = vmatpush1.msra.mxu0 0.0
    %421 = vmatprep.subr.mxu0 0.0
    %422 = vmatpush1.msra.mxu0 0.0
    %423 = vmatprep.subr.mxu0 0.0
    %424 = vmatpush1.msra.mxu0 0.0
    %425 = vmatprep.subr.mxu0 0.0
    %426 = vmatpush1.msra.mxu0 0.0
    %427 = vmatprep.subr.mxu0 0.0
    %428 = vmatpush1.msra.mxu0 0.0
    %429 = vmatprep.subr.mxu0 0.0
    %430 = vmatpush1.msra.mxu0 0.0
    %431 = vmatprep.subr.mxu0 0.0
    %432 = vmatpush1.msra.mxu0 0.0
    %433 = vmatprep.subr.mxu0 0.0
    %434 = vmatpush1.msra.mxu0 0.0
    %435 = vmatprep.subr.mxu0 0.0
    %436 = vmatpush1.msra.mxu0 0.0
    %437 = vmatprep.subr.mxu0 0.0
    %438 = vmatpush1.msra.mxu0 0.0
    %439 = vmatprep.subr.mxu0 0.0
    %440 = vmatpush1.msra.mxu0 0.0
    %441 = vmatprep.subr.mxu0 0.0
    %442 = vmatpush1.msra.mxu0 0.0
    %443 = vmatprep.mubr.f32.mxu0 0.0
    %444 = vmatmul.mubr.f32.gmra.mrb[0].mxu0 %v164
    %v445 = vpop.f32.mrb[0].mxu0
    %v446 = vadd.f32 %v149, %v445
    %v447 = vpop.f32.mrb[0].mxu0
    %v448 = vadd.f32 %v153, %v447
    %449 = vdwg.mxu0
    %v450 = vmax.f32 %v233, 0.0
    %v451 = vmax.f32 %v235, 0.0
    %v452 = vmax.f32 %v304, 0.0
    %v453 = vmax.f32 %v306, 0.0
    %v454 = vmax.f32 %v375, 0.0
    %v455 = vmax.f32 %v377, 0.0
    %v456 = vmax.f32 %v446, 0.0
    %v457 = vmax.f32 %v448, 0.0
    %v458 = vlaneseq
    %v459 = vand.u32 %v458, 127
    %v460 = vld [vmem:[#allocation8] sm:$0xff]
    %v461 = vld [vmem:[#allocation8 + $0x8] sm:$0xff]
    %v462 = vld [vmem:[#allocation8 + $0x10] sm:$0xff]
    %v463 = vld [vmem:[#allocation8 + $0x18] sm:$0xff]
    %v464 = vld [vmem:[#allocation8 + $0x20] sm:$0xff]
    %v465 = vld [vmem:[#allocation8 + $0x28] sm:$0xff]
    %v466 = vld [vmem:[#allocation8 + $0x30] sm:$0xff]
    %v467 = vld [vmem:[#allocation8 + $0x38] sm:$0xff]
    %v468 = vld [vmem:[#allocation8 + $0x40] sm:$0xff]
    %v469 = vld [vmem:[#allocation8 + $0x48] sm:$0xff]
    %v470 = vld [vmem:[#allocation8 + $0x50] sm:$0xff]
    %v471 = vld [vmem:[#allocation8 + $0x58] sm:$0xff]
    %v472 = vld [vmem:[#allocation8 + $0x60] sm:$0xff]
    %v473 = vld [vmem:[#allocation8 + $0x68] sm:$0xff]
    %v474 = vld [vmem:[#allocation8 + $0x70] sm:$0xff]
    %v475 = vld [vmem:[#allocation8 + $0x78] sm:$0xff]
    %v476 = vld [vmem:[#allocation8 + $0x80] sm:$0xff]
    %v477 = vld [vmem:[#allocation8 + $0x88] sm:$0xff]
    %v478 = vld [vmem:[#allocation8 + $0x90] sm:$0xff]
    %v479 = vld [vmem:[#allocation8 + $0x98] sm:$0xff]
    %v480 = vld [vmem:[#allocation8 + $0xa0] sm:$0xff]
    %v481 = vld [vmem:[#allocation8 + $0xa8] sm:$0xff]
    %v482 = vld [vmem:[#allocation8 + $0xb0] sm:$0xff]
    %v483 = vld [vmem:[#allocation8 + $0xb8] sm:$0xff]
    %v484 = vld [vmem:[#allocation8 + $0xc0] sm:$0xff]
    %v485 = vld [vmem:[#allocation8 + $0xc8] sm:$0xff]
    %v486 = vld [vmem:[#allocation8 + $0xd0] sm:$0xff]
    %v487 = vld [vmem:[#allocation8 + $0xd8] sm:$0xff]
    %v488 = vld [vmem:[#allocation8 + $0xe0] sm:$0xff]
    %v489 = vld [vmem:[#allocation8 + $0xe8] sm:$0xff]
    %v490 = vld [vmem:[#allocation8 + $0xf0] sm:$0xff]
    %v491 = vld [vmem:[#allocation8 + $0xf8] sm:$0xff]
    %v492 = vld [vmem:[#allocation8 + $0x100] sm:$0xff]
    %v493 = vld [vmem:[#allocation8 + $0x108] sm:$0xff]
    %v494 = vld [vmem:[#allocation8 + $0x110] sm:$0xff]
    %v495 = vld [vmem:[#allocation8 + $0x118] sm:$0xff]
    %v496 = vld [vmem:[#allocation8 + $0x120] sm:$0xff]
    %v497 = vld [vmem:[#allocation8 + $0x128] sm:$0xff]
    %v498 = vld [vmem:[#allocation8 + $0x130] sm:$0xff]
    %v499 = vld [vmem:[#allocation8 + $0x138] sm:$0xff]
    %v500 = vld [vmem:[#allocation8 + $0x140] sm:$0xff]
    %v501 = vld [vmem:[#allocation8 + $0x148] sm:$0xff]
    %v502 = vld [vmem:[#allocation8 + $0x150] sm:$0xff]
    %v503 = vld [vmem:[#allocation8 + $0x158] sm:$0xff]
    %v504 = vld [vmem:[#allocation8 + $0x160] sm:$0xff]
    %v505 = vld [vmem:[#allocation8 + $0x168] sm:$0xff]
    %v506 = vld [vmem:[#allocation8 + $0x170] sm:$0xff]
    %v507 = vld [vmem:[#allocation8 + $0x178] sm:$0xff]
    %v508 = vld [vmem:[#allocation8 + $0x180] sm:$0xff]
    %v509 = vld [vmem:[#allocation8 + $0x188] sm:$0xff]
    %v510 = vld [vmem:[#allocation8 + $0x190] sm:$0xff]
    %v511 = vld [vmem:[#allocation8 + $0x198] sm:$0xff]
    %v512 = vld [vmem:[#allocation8 + $0x1a0] sm:$0xff]
    %v513 = vld [vmem:[#allocation8 + $0x1a8] sm:$0xff]
    %v514 = vld [vmem:[#allocation8 + $0x1b0] sm:$0xff]
    %v515 = vld [vmem:[#allocation8 + $0x1b8] sm:$0xff]
    %v516 = vld [vmem:[#allocation8 + $0x1c0] sm:$0xff]
    %v517 = vld [vmem:[#allocation8 + $0x1c8] sm:$0xff]
    %v518 = vld [vmem:[#allocation8 + $0x1d0] sm:$0xff]
    %v519 = vld [vmem:[#allocation8 + $0x1d8] sm:$0xff]
    %v520 = vld [vmem:[#allocation8 + $0x1e0] sm:$0xff]
    %v521 = vld [vmem:[#allocation8 + $0x1e8] sm:$0xff]
    %v522 = vld [vmem:[#allocation8 + $0x1f0] sm:$0xff]
    %v523 = vld [vmem:[#allocation8 + $0x1f8] sm:$0xff]
    %v524 = vld [vmem:[#allocation9 + $0x1] ss:$0 sm:$0xff]
    %525 = vmatprep.subr.mxu0 0.0
    %526 = vmatpush1.msra.mxu0 %v460
    %527 = vmatprep.subr.mxu0 0.0
    %528 = vmatpush1.msra.mxu0 %v461
    %529 = vmatprep.subr.mxu0 0.0
    %530 = vmatpush1.msra.mxu0 %v462
    %531 = vmatprep.subr.mxu0 0.0
    %532 = vmatpush1.msra.mxu0 %v463
    %533 = vmatprep.subr.mxu0 0.0
    %534 = vmatpush1.msra.mxu0 %v464
    %535 = vmatprep.subr.mxu0 0.0
    %536 = vmatpush1.msra.mxu0 %v465
    %537 = vmatprep.subr.mxu0 0.0
    %538 = vmatpush1.msra.mxu0 %v466
    %539 = vmatprep.subr.mxu0 0.0
    %540 = vmatpush1.msra.mxu0 %v467
    %541 = vmatprep.subr.mxu0 0.0
    %542 = vmatpush1.msra.mxu0 %v468
    %543 = vmatprep.subr.mxu0 0.0
    %544 = vmatpush1.msra.mxu0 %v469
    %545 = vmatprep.subr.mxu0 0.0
    %546 = vmatpush1.msra.mxu0 %v470
    %547 = vmatprep.subr.mxu0 0.0
    %548 = vmatpush1.msra.mxu0 %v471
    %549 = vmatprep.subr.mxu0 0.0
    %550 = vmatpush1.msra.mxu0 %v472
    %551 = vmatprep.subr.mxu0 0.0
    %552 = vmatpush1.msra.mxu0 %v473
    %553 = vmatprep.subr.mxu0 0.0
    %554 = vmatpush1.msra.mxu0 %v474
    %555 = vmatprep.subr.mxu0 0.0
    %556 = vmatpush1.msra.mxu0 %v475
    %557 = vmatprep.subr.mxu0 0.0
    %558 = vmatpush1.msra.mxu0 %v476
    %559 = vmatprep.subr.mxu0 0.0
    %560 = vmatpush1.msra.mxu0 %v477
    %561 = vmatprep.subr.mxu0 0.0
    %562 = vmatpush1.msra.mxu0 %v478
    %563 = vmatprep.subr.mxu0 0.0
    %564 = vmatpush1.msra.mxu0 %v479
    %565 = vmatprep.subr.mxu0 0.0
    %566 = vmatpush1.msra.mxu0 %v480
    %567 = vmatprep.subr.mxu0 0.0
    %568 = vmatpush1.msra.mxu0 %v481
    %569 = vmatprep.subr.mxu0 0.0
    %570 = vmatpush1.msra.mxu0 %v482
    %571 = vmatprep.subr.mxu0 0.0
    %572 = vmatpush1.msra.mxu0 %v483
    %573 = vmatprep.subr.mxu0 0.0
    %574 = vmatpush1.msra.mxu0 %v484
    %575 = vmatprep.subr.mxu0 0.0
    %576 = vmatpush1.msra.mxu0 %v485
    %577 = vmatprep.subr.mxu0 0.0
    %578 = vmatpush1.msra.mxu0 %v486
    %579 = vmatprep.subr.mxu0 0.0
    %580 = vmatpush1.msra.mxu0 %v487
    %581 = vmatprep.subr.mxu0 0.0
    %582 = vmatpush1.msra.mxu0 %v488
    %583 = vmatprep.subr.mxu0 0.0
    %584 = vmatpush1.msra.mxu0 %v489
    %585 = vmatprep.subr.mxu0 0.0
    %586 = vmatpush1.msra.mxu0 %v490
    %587 = vmatprep.subr.mxu0 0.0
    %588 = vmatpush1.msra.mxu0 %v491
    %589 = vmatprep.mubr.f32.mxu0 %v451
    %590 = vmatmul.mubr.f32.gmra.mrb[0].mxu0 %v450
    %v591 = vpop.f32.mrb[0].mxu0
    %v592 = vadd.f32 %v524, %v591
    %v593 = vpop.f32.mrb[0].mxu0
    %594 = vdwg.mxu0
    %595 = vmatprep.subr.mxu0 0.0
    %596 = vmatpush1.msra.mxu0 %v492
    %597 = vmatprep.subr.mxu0 0.0
    %598 = vmatpush1.msra.mxu0 %v493
    %599 = vmatprep.subr.mxu0 0.0
    %600 = vmatpush1.msra.mxu0 %v494
    %601 = vmatprep.subr.mxu0 0.0
    %602 = vmatpush1.msra.mxu0 %v495
    %603 = vmatprep.subr.mxu0 0.0
    %604 = vmatpush1.msra.mxu0 %v496
    %605 = vmatprep.subr.mxu0 0.0
    %606 = vmatpush1.msra.mxu0 %v497
    %607 = vmatprep.subr.mxu0 0.0
    %608 = vmatpush1.msra.mxu0 %v498
    %609 = vmatprep.subr.mxu0 0.0
    %610 = vmatpush1.msra.mxu0 %v499
    %611 = vmatprep.subr.mxu0 0.0
    %612 = vmatpush1.msra.mxu0 %v500
    %613 = vmatprep.subr.mxu0 0.0
    %614 = vmatpush1.msra.mxu0 %v501
    %615 = vmatprep.subr.mxu0 0.0
    %616 = vmatpush1.msra.mxu0 %v502
    %617 = vmatprep.subr.mxu0 0.0
    %618 = vmatpush1.msra.mxu0 %v503
    %619 = vmatprep.subr.mxu0 0.0
    %620 = vmatpush1.msra.mxu0 %v504
    %621 = vmatprep.subr.mxu0 0.0
    %622 = vmatpush1.msra.mxu0 %v505
    %623 = vmatprep.subr.mxu0 0.0
    %624 = vmatpush1.msra.mxu0 %v506
    %625 = vmatprep.subr.mxu0 0.0
    %626 = vmatpush1.msra.mxu0 %v507
    %627 = vmatprep.subr.mxu0 0.0
    %628 = vmatpush1.msra.mxu0 %v508
    %629 = vmatprep.subr.mxu0 0.0
    %630 = vmatpush1.msra.mxu0 %v509
    %631 = vmatprep.subr.mxu0 0.0
    %632 = vmatpush1.msra.mxu0 %v510
    %633 = vmatprep.subr.mxu0 0.0
    %634 = vmatpush1.msra.mxu0 %v511
    %635 = vmatprep.subr.mxu0 0.0
    %636 = vmatpush1.msra.mxu0 %v512
    %637 = vmatprep.subr.mxu0 0.0
    %638 = vmatpush1.msra.mxu0 %v513
    %639 = vmatprep.subr.mxu0 0.0
    %640 = vmatpush1.msra.mxu0 %v514
    %641 = vmatprep.subr.mxu0 0.0
    %642 = vmatpush1.msra.mxu0 %v515
    %643 = vmatprep.subr.mxu0 0.0
    %644 = vmatpush1.msra.mxu0 %v516
    %645 = vmatprep.subr.mxu0 0.0
    %646 = vmatpush1.msra.mxu0 %v517
    %647 = vmatprep.subr.mxu0 0.0
    %648 = vmatpush1.msra.mxu0 %v518
    %649 = vmatprep.subr.mxu0 0.0
    %650 = vmatpush1.msra.mxu0 %v519
    %651 = vmatprep.subr.mxu0 0.0
    %652 = vmatpush1.msra.mxu0 %v520
    %653 = vmatprep.subr.mxu0 0.0
    %654 = vmatpush1.msra.mxu0 %v521
    %655 = vmatprep.subr.mxu0 0.0
    %656 = vmatpush1.msra.mxu0 %v522
    %657 = vmatprep.subr.mxu0 0.0
    %658 = vmatpush1.msra.mxu0 %v523
    %659 = vmatprep.mubr.f32.mxu0 %v453
    %660 = vmatmul.mubr.f32.gmra.mrb[0].mxu0 %v452
    %v661 = vpop.f32.mrb[0].mxu0
    %v662 = vadd.f32 %v592, %v661
    %v663 = vpop.f32.mrb[0].mxu0
    %664 = vdwg.mxu0
    %v665 = vmul.f32 %v662, 0.5
    %v666 = vtanh.pop %v665
    %v667 = vmul.f32 %v666, 0.5
    %v668 = vadd.f32 %v667, 0.5
    %v669 = vld [vmem:[#allocation9 + $0x2] ss:$0 sm:$0xff]
    %v670 = vmul.f32 %v668, %v669
    %671 = vadd.xlane.f32.xlu0 %v670
    %v672 = vpop.xlane.xlu0 %671
    %s673 = sld [smem:[#allocation11]]
    %v674 = vstv %s673
    %v675 = vadd.f32 %v672, %v674
    %v676 = vmul.f32 %v675, 0.5
    %v677 = vtanh.pop %v676
    %v678 = vmul.f32 %v677, 0.5
    %v679 = vadd.f32 %v678, 0.5
    %vm680 = vcmp.eq.s32.totalorder %v459, 0
    %v681 = vsel %vm680, %v675, 0.0
    %v682 = vadd.f32 %v681, 0.0
    %vm683 = vcmp.eq.s32.totalorder %v459, 1
    %v684 = vsel %vm683, %v679, 0.0
    %v685 = vadd.f32 %v682, %v684
    %s686 = scalar_lea.vmem [#allocation8], 512
    %v687 = vld [vmem:[%s686] sm:$0xff]
    %v688 = vld [vmem:[%s686 + $0x8] sm:$0xff]
    %v689 = vld [vmem:[%s686 + $0x10] sm:$0xff]
    %v690 = vld [vmem:[%s686 + $0x18] sm:$0xff]
    %v691 = vld [vmem:[%s686 + $0x20] sm:$0xff]
    %v692 = vld [vmem:[%s686 + $0x28] sm:$0xff]
    %v693 = vld [vmem:[%s686 + $0x30] sm:$0xff]
    %v694 = vld [vmem:[%s686 + $0x38] sm:$0xff]
    %v695 = vld [vmem:[%s686 + $0x40] sm:$0xff]
    %v696 = vld [vmem:[%s686 + $0x48] sm:$0xff]
    %v697 = vld [vmem:[%s686 + $0x50] sm:$0xff]
    %v698 = vld [vmem:[%s686 + $0x58] sm:$0xff]
    %v699 = vld [vmem:[%s686 + $0x60] sm:$0xff]
    %v700 = vld [vmem:[%s686 + $0x68] sm:$0xff]
    %v701 = vld [vmem:[%s686 + $0x70] sm:$0xff]
    %v702 = vld [vmem:[%s686 + $0x78] sm:$0xff]
    %v703 = vld [vmem:[%s686 + $0x80] sm:$0xff]
    %v704 = vld [vmem:[%s686 + $0x88] sm:$0xff]
    %v705 = vld [vmem:[%s686 + $0x90] sm:$0xff]
    %v706 = vld [vmem:[%s686 + $0x98] sm:$0xff]
    %v707 = vld [vmem:[%s686 + $0xa0] sm:$0xff]
    %v708 = vld [vmem:[%s686 + $0xa8] sm:$0xff]
    %v709 = vld [vmem:[%s686 + $0xb0] sm:$0xff]
    %v710 = vld [vmem:[%s686 + $0xb8] sm:$0xff]
    %v711 = vld [vmem:[%s686 + $0xc0] sm:$0xff]
    %v712 = vld [vmem:[%s686 + $0xc8] sm:$0xff]
    %v713 = vld [vmem:[%s686 + $0xd0] sm:$0xff]
    %v714 = vld [vmem:[%s686 + $0xd8] sm:$0xff]
    %v715 = vld [vmem:[%s686 + $0xe0] sm:$0xff]
    %v716 = vld [vmem:[%s686 + $0xe8] sm:$0xff]
    %v717 = vld [vmem:[%s686 + $0xf0] sm:$0xff]
    %v718 = vld [vmem:[%s686 + $0xf8] sm:$0xff]
    %v719 = vld [vmem:[%s686 + $0x100] sm:$0xff]
    %v720 = vld [vmem:[%s686 + $0x108] sm:$0xff]
    %v721 = vld [vmem:[%s686 + $0x110] sm:$0xff]
    %v722 = vld [vmem:[%s686 + $0x118] sm:$0xff]
    %v723 = vld [vmem:[%s686 + $0x120] sm:$0xff]
    %v724 = vld [vmem:[%s686 + $0x128] sm:$0xff]
    %v725 = vld [vmem:[%s686 + $0x130] sm:$0xff]
    %v726 = vld [vmem:[%s686 + $0x138] sm:$0xff]
    %v727 = vld [vmem:[%s686 + $0x140] sm:$0xff]
    %v728 = vld [vmem:[%s686 + $0x148] sm:$0xff]
    %v729 = vld [vmem:[%s686 + $0x150] sm:$0xff]
    %v730 = vld [vmem:[%s686 + $0x158] sm:$0xff]
    %v731 = vld [vmem:[%s686 + $0x160] sm:$0xff]
    %v732 = vld [vmem:[%s686 + $0x168] sm:$0xff]
    %v733 = vld [vmem:[%s686 + $0x170] sm:$0xff]
    %v734 = vld [vmem:[%s686 + $0x178] sm:$0xff]
    %v735 = vld [vmem:[%s686 + $0x180] sm:$0xff]
    %v736 = vld [vmem:[%s686 + $0x188] sm:$0xff]
    %v737 = vld [vmem:[%s686 + $0x190] sm:$0xff]
    %v738 = vld [vmem:[%s686 + $0x198] sm:$0xff]
    %v739 = vld [vmem:[%s686 + $0x1a0] sm:$0xff]
    %v740 = vld [vmem:[%s686 + $0x1a8] sm:$0xff]
    %v741 = vld [vmem:[%s686 + $0x1b0] sm:$0xff]
    %v742 = vld [vmem:[%s686 + $0x1b8] sm:$0xff]
    %v743 = vld [vmem:[%s686 + $0x1c0] sm:$0xff]
    %v744 = vld [vmem:[%s686 + $0x1c8] sm:$0xff]
    %v745 = vld [vmem:[%s686 + $0x1d0] sm:$0xff]
    %v746 = vld [vmem:[%s686 + $0x1d8] sm:$0xff]
    %v747 = vld [vmem:[%s686 + $0x1e0] sm:$0xff]
    %v748 = vld [vmem:[%s686 + $0x1e8] sm:$0xff]
    %v749 = vld [vmem:[%s686 + $0x1f0] sm:$0xff]
    %v750 = vld [vmem:[%s686 + $0x1f8] sm:$0xff]
    %v751 = vld [vmem:[#allocation9 + $0x9] ss:$0 sm:$0xff]
    %752 = vmatprep.subr.mxu0 0.0
    %753 = vmatpush1.msra.mxu0 %v687
    %754 = vmatprep.subr.mxu0 0.0
    %755 = vmatpush1.msra.mxu0 %v688
    %756 = vmatprep.subr.mxu0 0.0
    %757 = vmatpush1.msra.mxu0 %v689
    %758 = vmatprep.subr.mxu0 0.0
    %759 = vmatpush1.msra.mxu0 %v690
    %760 = vmatprep.subr.mxu0 0.0
    %761 = vmatpush1.msra.mxu0 %v691
    %762 = vmatprep.subr.mxu0 0.0
    %763 = vmatpush1.msra.mxu0 %v692
    %764 = vmatprep.subr.mxu0 0.0
    %765 = vmatpush1.msra.mxu0 %v693
    %766 = vmatprep.subr.mxu0 0.0
    %767 = vmatpush1.msra.mxu0 %v694
    %768 = vmatprep.subr.mxu0 0.0
    %769 = vmatpush1.msra.mxu0 %v695
    %770 = vmatprep.subr.mxu0 0.0
    %771 = vmatpush1.msra.mxu0 %v696
    %772 = vmatprep.subr.mxu0 0.0
    %773 = vmatpush1.msra.mxu0 %v697
    %774 = vmatprep.subr.mxu0 0.0
    %775 = vmatpush1.msra.mxu0 %v698
    %776 = vmatprep.subr.mxu0 0.0
    %777 = vmatpush1.msra.mxu0 %v699
    %778 = vmatprep.subr.mxu0 0.0
    %779 = vmatpush1.msra.mxu0 %v700
    %780 = vmatprep.subr.mxu0 0.0
    %781 = vmatpush1.msra.mxu0 %v701
    %782 = vmatprep.subr.mxu0 0.0
    %783 = vmatpush1.msra.mxu0 %v702
    %784 = vmatprep.subr.mxu0 0.0
    %785 = vmatpush1.msra.mxu0 %v703
    %786 = vmatprep.subr.mxu0 0.0
    %787 = vmatpush1.msra.mxu0 %v704
    %788 = vmatprep.subr.mxu0 0.0
    %789 = vmatpush1.msra.mxu0 %v705
    %790 = vmatprep.subr.mxu0 0.0
    %791 = vmatpush1.msra.mxu0 %v706
    %792 = vmatprep.subr.mxu0 0.0
    %793 = vmatpush1.msra.mxu0 %v707
    %794 = vmatprep.subr.mxu0 0.0
    %795 = vmatpush1.msra.mxu0 %v708
    %796 = vmatprep.subr.mxu0 0.0
    %797 = vmatpush1.msra.mxu0 %v709
    %798 = vmatprep.subr.mxu0 0.0
    %799 = vmatpush1.msra.mxu0 %v710
    %800 = vmatprep.subr.mxu0 0.0
    %801 = vmatpush1.msra.mxu0 %v711
    %802 = vmatprep.subr.mxu0 0.0
    %803 = vmatpush1.msra.mxu0 %v712
    %804 = vmatprep.subr.mxu0 0.0
    %805 = vmatpush1.msra.mxu0 %v713
    %806 = vmatprep.subr.mxu0 0.0
    %807 = vmatpush1.msra.mxu0 %v714
    %808 = vmatprep.subr.mxu0 0.0
    %809 = vmatpush1.msra.mxu0 %v715
    %810 = vmatprep.subr.mxu0 0.0
    %811 = vmatpush1.msra.mxu0 %v716
    %812 = vmatprep.subr.mxu0 0.0
    %813 = vmatpush1.msra.mxu0 %v717
    %814 = vmatprep.subr.mxu0 0.0
    %815 = vmatpush1.msra.mxu0 %v718
    %816 = vmatprep.mubr.f32.mxu0 %v455
    %817 = vmatmul.mubr.f32.gmra.mrb[0].mxu0 %v454
    %v818 = vpop.f32.mrb[0].mxu0
    %v819 = vadd.f32 %v751, %v818
    %v820 = vpop.f32.mrb[0].mxu0
    %821 = vdwg.mxu0
    %822 = vmatprep.subr.mxu0 0.0
    %823 = vmatpush1.msra.mxu0 %v719
    %824 = vmatprep.subr.mxu0 0.0
    %825 = vmatpush1.msra.mxu0 %v720
    %826 = vmatprep.subr.mxu0 0.0
    %827 = vmatpush1.msra.mxu0 %v721
    %828 = vmatprep.subr.mxu0 0.0
    %829 = vmatpush1.msra.mxu0 %v722
    %830 = vmatprep.subr.mxu0 0.0
    %831 = vmatpush1.msra.mxu0 %v723
    %832 = vmatprep.subr.mxu0 0.0
    %833 = vmatpush1.msra.mxu0 %v724
    %834 = vmatprep.subr.mxu0 0.0
    %835 = vmatpush1.msra.mxu0 %v725
    %836 = vmatprep.subr.mxu0 0.0
    %837 = vmatpush1.msra.mxu0 %v726
    %838 = vmatprep.subr.mxu0 0.0
    %839 = vmatpush1.msra.mxu0 %v727
    %840 = vmatprep.subr.mxu0 0.0
    %841 = vmatpush1.msra.mxu0 %v728
    %842 = vmatprep.subr.mxu0 0.0
    %843 = vmatpush1.msra.mxu0 %v729
    %844 = vmatprep.subr.mxu0 0.0
    %845 = vmatpush1.msra.mxu0 %v730
    %846 = vmatprep.subr.mxu0 0.0
    %847 = vmatpush1.msra.mxu0 %v731
    %848 = vmatprep.subr.mxu0 0.0
    %849 = vmatpush1.msra.mxu0 %v732
    %850 = vmatprep.subr.mxu0 0.0
    %851 = vmatpush1.msra.mxu0 %v733
    %852 = vmatprep.subr.mxu0 0.0
    %853 = vmatpush1.msra.mxu0 %v734
    %854 = vmatprep.subr.mxu0 0.0
    %855 = vmatpush1.msra.mxu0 %v735
    %856 = vmatprep.subr.mxu0 0.0
    %857 = vmatpush1.msra.mxu0 %v736
    %858 = vmatprep.subr.mxu0 0.0
    %859 = vmatpush1.msra.mxu0 %v737
    %860 = vmatprep.subr.mxu0 0.0
    %861 = vmatpush1.msra.mxu0 %v738
    %862 = vmatprep.subr.mxu0 0.0
    %863 = vmatpush1.msra.mxu0 %v739
    %864 = vmatprep.subr.mxu0 0.0
    %865 = vmatpush1.msra.mxu0 %v740
    %866 = vmatprep.subr.mxu0 0.0
    %867 = vmatpush1.msra.mxu0 %v741
    %868 = vmatprep.subr.mxu0 0.0
    %869 = vmatpush1.msra.mxu0 %v742
    %870 = vmatprep.subr.mxu0 0.0
    %871 = vmatpush1.msra.mxu0 %v743
    %872 = vmatprep.subr.mxu0 0.0
    %873 = vmatpush1.msra.mxu0 %v744
    %874 = vmatprep.subr.mxu0 0.0
    %875 = vmatpush1.msra.mxu0 %v745
    %876 = vmatprep.subr.mxu0 0.0
    %877 = vmatpush1.msra.mxu0 %v746
    %878 = vmatprep.subr.mxu0 0.0
    %879 = vmatpush1.msra.mxu0 %v747
    %880 = vmatprep.subr.mxu0 0.0
    %881 = vmatpush1.msra.mxu0 %v748
    %882 = vmatprep.subr.mxu0 0.0
    %883 = vmatpush1.msra.mxu0 %v749
    %884 = vmatprep.subr.mxu0 0.0
    %885 = vmatpush1.msra.mxu0 %v750
    %886 = vmatprep.mubr.f32.mxu0 %v457
    %887 = vmatmul.mubr.f32.gmra.mrb[0].mxu0 %v456
    %v888 = vpop.f32.mrb[0].mxu0
    %v889 = vadd.f32 %v819, %v888
    %v890 = vpop.f32.mrb[0].mxu0
    %891 = vdwg.mxu0
    %v892 = vmul.f32 %v889, 0.5
    %v893 = vtanh.pop %v892
    %v894 = vmul.f32 %v893, 0.5
    %v895 = vadd.f32 %v894, 0.5
    %v896 = vld [vmem:[#allocation9 + $0xa] ss:$0 sm:$0xff]
    %v897 = vmul.f32 %v895, %v896
    %898 = vadd.xlane.f32.xlu0 %v897
    %v899 = vpop.xlane.xlu0 %898
    %s900 = sld [smem:[#allocation11 + $0x1]]
    %v901 = vstv %s900
    %v902 = vadd.f32 %v899, %v901
    %v903 = vmul.f32 %v902, 0.5
    %v904 = vtanh.pop %v903
    %v905 = vmul.f32 %v904, 0.5
    %v906 = vadd.f32 %v905, 0.5
    %vm907 = vcmp.eq.s32.totalorder %v459, 2
    %v908 = vsel %vm907, %v902, 0.0
    %v909 = vadd.f32 %v685, %v908
    %vm910 = vcmp.eq.s32.totalorder %v459, 3
    %v911 = vsel %vm910, %v906, 0.0
    %v912 = vadd.f32 %v909, %v911
    %913 = vst [vmem:[#allocation12] sm:$0xff] %v912
    // Predicated region
    $region42: #{_run_pallas.1} parent=1 // pred_check
      _
    $region43: #{_run_pallas.1} parent=1 // pred_check_branch
      %915 = sbr.rel (0) target = $region45
    $region44: #{_run_pallas.1} parent=1 // pred_region
      %s917 = ssub.s32 128, 128
      %918 = vsyncadd [#allocation4], %s917
      %s920 = sshll.u32 [#allocation12], 4
      %s921 = int_to_ptr.vmem [resolvable:$true] %s920
      %923 = dma.vmem_to_hbm [thread:$0]  %s921, 128, %s5, [#allocation4]
    $region45: #{_run_pallas.1} parent=1 // pred_fallthru
      _
    // Predicated region
    $region46: #{_run_pallas.1} parent=1 // pred_check
      _
    $region47: #{_run_pallas.1} parent=1 // pred_check_branch
      %925 = sbr.rel (0) target = $region49
    $region48: #{_run_pallas.1} parent=1 // pred_region
      %926 = dma.done [#allocation4], 128
    $region49: #{_run_pallas.1} parent=1 // pred_fallthru
      _
    %927 = vsyncpa [#allocation3], 1
    %928 = vsyncpa [#allocation7], 1
    %929 = vsyncpa [#allocation10], 1
    %930 = vsyncpa [#allocation4], 1
    %931 = vsyncpa [#allocation5], 1

</llo_original>
